<compile_context>
chip_gen: v7x
topology: tpu7x:2x2x1
jax: 0.10.0
libtpu: 0.0.40
codegen_flags: <defaults>
</compile_context>

<pallas_src>
import functools
import math

import jax
import jax.numpy as jnp
from jax.experimental import pallas as pl
from jax.experimental.pallas import tpu as pltpu


# ----------------------------------------------------------------------------
# Shared tiny MLP: sigmoid(fc2(relu(fc1(avg))) + fc2(relu(fc1(max)))).
# Both branches are fused into a single (2B, C) matmul chain.
# ----------------------------------------------------------------------------
def _attention_from_pooled(pa, pm, w1, w2):
    b = pa.shape[0]
    stacked = jnp.concatenate([pa, pm], axis=0)                       # (2B, C)
    h = jnp.maximum(
        jnp.dot(stacked, w1, preferred_element_type=jnp.float32), 0.0)
    o = jnp.dot(h, w2, preferred_element_type=jnp.float32)            # (2B, C)
    return jax.nn.sigmoid(o[:b, :] + o[b:, :])                        # (B, C) f32


# ----------------------------------------------------------------------------
# Fused single-pass kernel (whole slab resident in VMEM).
# ----------------------------------------------------------------------------
def _fused_kernel(x_ref, w1_ref, w2_ref, out_ref, *, hw_total):
    xf = x_ref[...].astype(jnp.float32)                               # (B, C, HW)
    pa = jnp.sum(xf, axis=-1) * (1.0 / hw_total)                      # avg pool
    pm = jnp.max(xf, axis=-1)                                         # max pool
    att = _attention_from_pooled(pa, pm, w1_ref[...], w2_ref[...])    # (B, C)
    out_ref[...] = (xf * att[:, :, None]).astype(out_ref.dtype)


# ----------------------------------------------------------------------------
# Kernel 1 (tiled path): global avg+max pooling reduction over H*W, fused with
# the channel-attention MLP at the final grid step.
# ----------------------------------------------------------------------------
def _pool_attn_kernel(x_ref, w1_ref, w2_ref, att_ref, sum_ref, max_ref,
                      *, hw_total, t_hw, needs_mask):
    s = pl.program_id(0)

    @pl.when(s == 0)
    def _init():
        sum_ref[...] = jnp.zeros(sum_ref.shape, sum_ref.dtype)
        max_ref[...] = jnp.full(max_ref.shape, -jnp.inf, max_ref.dtype)

    blk = x_ref[...].astype(jnp.float32)                              # (B, C, t_hw)
    if needs_mask:
        lane = jax.lax.broadcasted_iota(jnp.int32, (1, 1, t_hw), 2)
        valid = (s * t_hw + lane) < hw_total
        blk_sum = jnp.where(valid, blk, 0.0)
        blk_max = jnp.where(valid, blk, -jnp.inf)
    else:
        blk_sum = blk
        blk_max = blk

    sum_ref[...] += jnp.sum(blk_sum, axis=-1)                         # (B, C)
    max_ref[...] = jnp.maximum(max_ref[...], jnp.max(blk_max, axis=-1))

    @pl.when(s == pl.num_programs(0) - 1)
    def _finalize():
        pa = sum_ref[...] * (1.0 / hw_total)                          # avg pool
        pm = max_ref[...]                                             # max pool
        att_ref[...] = _attention_from_pooled(
            pa, pm, w1_ref[...], w2_ref[...]).astype(att_ref.dtype)


# ----------------------------------------------------------------------------
# Kernel 2 (tiled path): apply the per-(batch, channel) scale over H*W tiles.
# ----------------------------------------------------------------------------
def _apply_kernel(x_ref, att_ref, out_ref):
    scaled = x_ref[...].astype(jnp.float32) * att_ref[...][:, :, None]
    out_ref[...] = scaled.astype(out_ref.dtype)


# ----------------------------------------------------------------------------
# Wrapper
# ----------------------------------------------------------------------------
_MAX_BLOCK_BYTES = 2 * 1024 * 1024        # keeps 2x-in + 2x-out buffering well
                                          # under the smallest default scoped
                                          # VMEM (v5e: 16 MiB)


def _pick_spatial_tile(b, c, hw, itemsize, max_block_bytes=_MAX_BLOCK_BYTES):
    """Lane-dense (multiple of 128) spatial tile, capped by a VMEM byte budget."""
    if hw <= 128:
        return hw                         # full (last) dim -> always legal
    t = max(128, (min(hw, 2048) // 128) * 128)
    while t > 128 and b * c * t * itemsize > max_block_bytes:
        t -= 128
    return t


def channel_attention_forward(x_nchw, w1, w2, *,
                              fused_bytes_limit=_MAX_BLOCK_BYTES):
    b, c, h, w = x_nchw.shape
    hw = h * w
    cr = w1.shape[1]
    x = x_nchw.reshape(b, c, hw)                   # channel-major, lanes = H*W
    itemsize = x.dtype.itemsize
    slab_bytes = b * c * hw * itemsize

    # ---- fast path: whole slab fits comfortably in VMEM --------------------
    if slab_bytes <= fused_bytes_limit:
        out = pl.pallas_call(
            functools.partial(_fused_kernel, hw_total=hw),
            out_shape=jax.ShapeDtypeStruct((b, c, hw), x.dtype),
            grid=(1,),
            in_specs=[
                pl.BlockSpec((b, c, hw), lambda i: (0, 0, 0)),
                pl.BlockSpec((c, cr), lambda i: (0, 0)),
                pl.BlockSpec((cr, c), lambda i: (0, 0)),
            ],
            out_specs=pl.BlockSpec((b, c, hw), lambda i: (0, 0, 0)),
        )(x, w1, w2)
        return out.reshape(b, c, h, w)

    # ---- tiled two-pass path -----------------------------------------------
    t_hw = _pick_spatial_tile(b, c, hw, itemsize)
    grid = (pl.cdiv(hw, t_hw),)
    needs_mask = (hw % t_hw) != 0

    # pass 1: pooled stats + attention vector (B, C)
    att = pl.pallas_call(
        functools.partial(_pool_attn_kernel,
                          hw_total=hw, t_hw=t_hw, needs_mask=needs_mask),
        out_shape=jax.ShapeDtypeStruct((b, c), jnp.float32),
        grid=grid,
        in_specs=[
            pl.BlockSpec((b, c, t_hw), lambda s: (0, 0, s)),
            pl.BlockSpec((c, cr), lambda s: (0, 0)),
            pl.BlockSpec((cr, c), lambda s: (0, 0)),
        ],
        out_specs=pl.BlockSpec((b, c), lambda s: (0, 0)),
        scratch_shapes=[
            pltpu.VMEM((b, c), jnp.float32),   # running sum
            pltpu.VMEM((b, c), jnp.float32),   # running max
        ],
        compiler_params=pltpu.CompilerParams(
            dimension_semantics=("arbitrary",)),
    )(x, w1, w2)

    # pass 2: out = x * att (tiled, parallel -> megacore on v7x)
    out = pl.pallas_call(
        _apply_kernel,
        out_shape=jax.ShapeDtypeStruct((b, c, hw), x.dtype),
        grid=grid,
        in_specs=[
            pl.BlockSpec((b, c, t_hw), lambda s: (0, 0, s)),
            pl.BlockSpec((b, c), lambda s: (0, 0)),
        ],
        out_specs=pl.BlockSpec((b, c, t_hw), lambda s: (0, 0, s)),
        compiler_params=pltpu.CompilerParams(
            dimension_semantics=("parallel",)),
    )(x, att)

    return out.reshape(b, c, h, w)


# ----------------------------------------------------------------------------
# Pure-JAX reference (mirrors the PyTorch module) for a correctness check.
# ----------------------------------------------------------------------------
def channel_attention_ref(x, w1, w2):
    pa = jnp.mean(x, axis=(2, 3))                              # (B, C)
    pm = jnp.max(x, axis=(2, 3))                               # (B, C)
    a = jnp.maximum(pa @ w1, 0.0) @ w2
    m = jnp.maximum(pm @ w1, 0.0) @ w2
    att = jax.nn.sigmoid(a + m)
    return x * att[:, :, None, None]


if __name__ == "__main__":
    REDUCTION = 16

    def make_inputs(key, b, c, h, w):
        kx, k1, k2 = jax.random.split(key, 3)
        cr = c // REDUCTION
        x = jax.random.normal(kx, (b, c, h, w), jnp.float32)              # NCHW
        # fc1: Conv2d(C, C//r, 1, bias=False) -> stored pre-transposed (C, C//r)
        w1 = jax.random.normal(k1, (c, cr), jnp.float32) * (1.0 / math.sqrt(c))
        # fc2: Conv2d(C//r, C, 1, bias=False) -> stored pre-transposed (C//r, C)
        w2 = jax.random.normal(k2, (cr, c), jnp.float32) * (1.0 / math.sqrt(cr))
        return x, w1, w2

    fwd = jax.jit(channel_attention_forward,
                  static_argnames=("fused_bytes_limit",))

    key = jax.random.PRNGKey(0)
    k_a, k_b = jax.random.split(key)

    # Small feature map -> fused single-pass path.
    x, w1, w2 = make_inputs(k_a, 2, 64, 16, 16)
    out = jax.block_until_ready(fwd(x, w1, w2))
    ref = channel_attention_ref(x, w1, w2)
    assert out.shape == x.shape, out.shape
    assert bool(jnp.all(jnp.isfinite(out)))
    assert bool(jnp.allclose(out, ref, rtol=1e-4, atol=1e-4)), \
        float(jnp.max(jnp.abs(out - ref)))

    # Larger feature map, forced down the tiled two-pass path
    # (multi-step reduction grid + masked tail tile).
    x, w1, w2 = make_inputs(k_b, 2, 64, 40, 40)
    out = jax.block_until_ready(fwd(x, w1, w2, fused_bytes_limit=0))
    ref = channel_attention_ref(x, w1, w2)
    assert out.shape == x.shape, out.shape
    assert bool(jnp.all(jnp.isfinite(out)))
    assert bool(jnp.allclose(out, ref, rtol=1e-4, atol=1e-4)), \
        float(jnp.max(jnp.abs(out - ref)))

    print("KERNEL_OK")
</pallas_src>

<mosaic_0001>
module attributes {stable_mosaic.version = 11 : i64} {
  func.func @_fused_kernel(%arg0: i32, %arg1: memref<2x64x256xf32, #tpu.memory_space<vmem>>, %arg2: memref<64x4xf32, #tpu.memory_space<vmem>>, %arg3: memref<4x64xf32, #tpu.memory_space<vmem>>, %arg4: memref<2x64x256xf32, #tpu.memory_space<vmem>>) attributes {dimension_semantics = [#tpu.dimension_semantics<arbitrary>], iteration_bounds = array<i64: 1>, scalar_prefetch = 0 : i64, scratch_operands = 0 : i64, tpu.core_type = #tpu.core_type<tc>, window_params = [{pipeline_mode = #tpu.pipeline_mode<synchronous>, transform_indices = @transform_0, window_bounds = array<i64: 2, 64, 256>}, {pipeline_mode = #tpu.pipeline_mode<synchronous>, transform_indices = @transform_1, window_bounds = array<i64: 64, 4>}, {pipeline_mode = #tpu.pipeline_mode<synchronous>, transform_indices = @transform_2, window_bounds = array<i64: 4, 64>}, {pipeline_mode = #tpu.pipeline_mode<synchronous>, transform_indices = @transform_3, window_bounds = array<i64: 2, 64, 256>}]} {
    %c0 = arith.constant 0 : index
    %c0_0 = arith.constant 0 : index
    %c0_1 = arith.constant 0 : index
    %0 = vector.load %arg1[%c0, %c0_0, %c0_1] : memref<2x64x256xf32, #tpu.memory_space<vmem>>, vector<2x64x256xf32>
    %cst = arith.constant dense<0.000000e+00> : vector<2x64xf32>
    %1 = vector.multi_reduction <add>, %0, %cst [2] : vector<2x64x256xf32> to vector<2x64xf32>
    %cst_2 = arith.constant 3.906250e-03 : f32
    %2 = vector.broadcast %cst_2 : f32 to vector<2x64xf32>
    %3 = arith.mulf %1, %2 : vector<2x64xf32>
    %cst_3 = arith.constant dense<0xFF800000> : vector<2x64xf32>
    %4 = vector.multi_reduction <maximumf>, %0, %cst_3 [2] : vector<2x64x256xf32> to vector<2x64xf32>
    %c0_4 = arith.constant 0 : index
    %c0_5 = arith.constant 0 : index
    %5 = vector.load %arg2[%c0_4, %c0_5] : memref<64x4xf32, #tpu.memory_space<vmem>>, vector<64x4xf32>
    %c0_6 = arith.constant 0 : index
    %c0_7 = arith.constant 0 : index
    %6 = vector.load %arg3[%c0_6, %c0_7] : memref<4x64xf32, #tpu.memory_space<vmem>>, vector<4x64xf32>
    %7 = tpu.concatenate %3, %4 in 0 : vector<2x64xf32>, vector<2x64xf32> -> vector<4x64xf32>
    %cst_8 = arith.constant dense<0.000000e+00> : vector<4x4xf32>
    %8 = tpu.matmul %7, %5, %cst_8 {dimension_numbers = #tpu.dot_dimension_numbers<[1], [0], [0], [1], [0, 0, 1, 1], [], []>} : vector<4x64xf32>, vector<64x4xf32>, vector<4x4xf32> -> vector<4x4xf32>
    %cst_9 = arith.constant 0.000000e+00 : f32
    %9 = vector.broadcast %cst_9 : f32 to vector<4x4xf32>
    %10 = arith.maximumf %8, %9 : vector<4x4xf32>
    %cst_10 = arith.constant dense<0.000000e+00> : vector<4x64xf32>
    %11 = tpu.matmul %10, %6, %cst_10 {dimension_numbers = #tpu.dot_dimension_numbers<[1], [0], [0], [1], [0, 0, 1, 1], [], []>} : vector<4x4xf32>, vector<4x64xf32>, vector<4x64xf32> -> vector<4x64xf32>
    %12 = vector.extract_strided_slice %11 {offsets = [0, 0], sizes = [2, 64], strides = [1, 1]} : vector<4x64xf32> to vector<2x64xf32>
    %13 = vector.extract_strided_slice %11 {offsets = [2, 0], sizes = [2, 64], strides = [1, 1]} : vector<4x64xf32> to vector<2x64xf32>
    %14 = arith.addf %12, %13 : vector<2x64xf32>
    %15 = arith.negf %14 : vector<2x64xf32>
    %16 = math.exp %15 : vector<2x64xf32>
    %cst_11 = arith.constant 1.000000e+00 : f32
    %17 = vector.broadcast %cst_11 : f32 to vector<2x64xf32>
    %18 = arith.addf %17, %16 : vector<2x64xf32>
    %19 = arith.divf %17, %18 : vector<2x64xf32>
    %20 = vector.shape_cast %19 : vector<2x64xf32> to vector<2x64x1xf32>
    %21 = vector.broadcast %20 : vector<2x64x1xf32> to vector<2x64x256xf32>
    %22 = arith.mulf %0, %21 : vector<2x64x256xf32>
    %c0_12 = arith.constant 0 : index
    %c0_13 = arith.constant 0 : index
    %c0_14 = arith.constant 0 : index
    %23 = vector.load %arg4[%c0_12, %c0_13, %c0_14] : memref<2x64x256xf32, #tpu.memory_space<vmem>>, vector<2x64x256xf32>
    tpu.vector_store %arg4[%c0_12, %c0_13, %c0_14], %22 {strides = array<i32>} : memref<2x64x256xf32, #tpu.memory_space<vmem>>, vector<2x64x256xf32>,
    return
  }
  func.func @transform_0(%arg0: i32) -> (i32, i32, i32) {
    %c0_i32 = arith.constant 0 : i32
    %c0_i32_0 = arith.constant 0 : i32
    %c0_i32_1 = arith.constant 0 : i32
    %c0_i32_2 = arith.constant 0 : i32
    return %c0_i32, %c0_i32_0, %c0_i32_1 : i32, i32, i32
  }
  func.func @transform_1(%arg0: i32) -> (i32, i32) {
    %c0_i32 = arith.constant 0 : i32
    %c0_i32_0 = arith.constant 0 : i32
    %c0_i32_1 = arith.constant 0 : i32
    return %c0_i32, %c0_i32_0 : i32, i32
  }
  func.func @transform_2(%arg0: i32) -> (i32, i32) {
    %c0_i32 = arith.constant 0 : i32
    %c0_i32_0 = arith.constant 0 : i32
    %c0_i32_1 = arith.constant 0 : i32
    return %c0_i32, %c0_i32_0 : i32, i32
  }
  func.func @transform_3(%arg0: i32) -> (i32, i32, i32) {
    %c0_i32 = arith.constant 0 : i32
    %c0_i32_0 = arith.constant 0 : i32
    %c0_i32_1 = arith.constant 0 : i32
    %c0_i32_2 = arith.constant 0 : i32
    return %c0_i32, %c0_i32_0, %c0_i32_1 : i32, i32, i32
  }
}

</mosaic_0001>

<llo_original>
// kernel: channel_attention_forward.1
$region0: #{channel_attention_forward.1}
  #allocation0 [shape = 'u32[]', space=smem, size = 0x4, offset = 0x4, fixed_abs, tag = 'smem constant byte address 0x4 - core index']
  #allocation1 [shape = 'u32[144,128]{1,0:T(1,128)}', space=vmem, size = 0x12000, scoped, tag = 'internal scratch']
  %s0 = inlined_call_operand.vmem [shape: f32[2,64,256], index: 0, kind: input, shape index: {}]
  %s1 = inlined_call_operand.vmem [shape: f32[64,4], index: 1, kind: input, shape index: {}]
  %s2 = inlined_call_operand.vmem [shape: f32[4,64], index: 2, kind: input, shape index: {}]
  %s3 = inlined_call_operand.vmem [shape: f32[2,64,256], index: 3, kind: output, shape index: {}]
  %s4 = sld [smem:[#allocation0]]
  $region22: #{channel_attention_forward.1} parent=0
    _
  %s6 = ssub.s32 1, %s4
  %s7 = scalar_select 0, %s6, %s4
  // Predicated region
  $region2: #{channel_attention_forward.1} parent=0 // pred_check
    _
  $region3: #{channel_attention_forward.1} parent=0 // pred_check_branch
    %9 = sbr.rel (0) target = $region5
  $region4: #{channel_attention_forward.1} parent=0 // pred_region
    _
  $region5: #{channel_attention_forward.1} parent=0 // pred_fallthru
    _
  // Predicated region
  $region6: #{channel_attention_forward.1} parent=0 // pred_check
    _
  $region7: #{channel_attention_forward.1} parent=0 // pred_check_branch
    %11 = sbr.rel (0) target = $region9
  $region8: #{channel_attention_forward.1} parent=0 // pred_region
    _
  $region9: #{channel_attention_forward.1} parent=0 // pred_fallthru
    _
  // Predicated region
  $region10: #{channel_attention_forward.1} parent=0 // pred_check
    _
  $region11: #{channel_attention_forward.1} parent=0 // pred_check_branch
    %13 = sbr.rel (0) target = $region13
  $region12: #{channel_attention_forward.1} parent=0 // pred_region
    _
  $region13: #{channel_attention_forward.1} parent=0 // pred_fallthru
    _
  %v14 = vld [vmem:[%s0] sm:$0xff]
  %v15 = vld [vmem:[%s0 + $0x8] sm:$0xff]
  %v16 = vld [vmem:[%s0 + $0x10] sm:$0xff]
  %v17 = vld [vmem:[%s0 + $0x18] sm:$0xff]
  %v18 = vld [vmem:[%s0 + $0x20] sm:$0xff]
  %v19 = vld [vmem:[%s0 + $0x28] sm:$0xff]
  %v20 = vld [vmem:[%s0 + $0x30] sm:$0xff]
  %v21 = vld [vmem:[%s0 + $0x38] sm:$0xff]
  %v22 = vld [vmem:[%s0 + $0x40] sm:$0xff]
  %v23 = vld [vmem:[%s0 + $0x48] sm:$0xff]
  %v24 = vld [vmem:[%s0 + $0x50] sm:$0xff]
  %v25 = vld [vmem:[%s0 + $0x58] sm:$0xff]
  %v26 = vld [vmem:[%s0 + $0x60] sm:$0xff]
  %v27 = vld [vmem:[%s0 + $0x68] sm:$0xff]
  %v28 = vld [vmem:[%s0 + $0x70] sm:$0xff]
  %v29 = vld [vmem:[%s0 + $0x78] sm:$0xff]
  %v30 = vld [vmem:[%s0 + $0x80] sm:$0xff]
  %v31 = vld [vmem:[%s0 + $0x88] sm:$0xff]
  %v32 = vld [vmem:[%s0 + $0x90] sm:$0xff]
  %v33 = vld [vmem:[%s0 + $0x98] sm:$0xff]
  %v34 = vld [vmem:[%s0 + $0xa0] sm:$0xff]
  %v35 = vld [vmem:[%s0 + $0xa8] sm:$0xff]
  %v36 = vld [vmem:[%s0 + $0xb0] sm:$0xff]
  %v37 = vld [vmem:[%s0 + $0xb8] sm:$0xff]
  %v38 = vld [vmem:[%s0 + $0xc0] sm:$0xff]
  %v39 = vld [vmem:[%s0 + $0xc8] sm:$0xff]
  %v40 = vld [vmem:[%s0 + $0xd0] sm:$0xff]
  %v41 = vld [vmem:[%s0 + $0xd8] sm:$0xff]
  %v42 = vld [vmem:[%s0 + $0xe0] sm:$0xff]
  %v43 = vld [vmem:[%s0 + $0xe8] sm:$0xff]
  %v44 = vld [vmem:[%s0 + $0xf0] sm:$0xff]
  %v45 = vld [vmem:[%s0 + $0xf8] sm:$0xff]
  %v46 = vadd.f32 %v14, %v15
  %47 = vadd.xlane.f32.xlu0 %v46
  %v48 = vpop.xlane.xlu0 %47
  %v49 = vadd.f32 %v16, %v17
  %50 = vadd.xlane.f32.xlu0 %v49
  %v51 = vpop.xlane.xlu0 %50
  %v52 = vadd.f32 %v18, %v19
  %53 = vadd.xlane.f32.xlu0 %v52
  %v54 = vpop.xlane.xlu0 %53
  %v55 = vadd.f32 %v20, %v21
  %56 = vadd.xlane.f32.xlu0 %v55
  %v57 = vpop.xlane.xlu0 %56
  %v58 = vadd.f32 %v22, %v23
  %59 = vadd.xlane.f32.xlu0 %v58
  %v60 = vpop.xlane.xlu0 %59
  %v61 = vadd.f32 %v24, %v25
  %62 = vadd.xlane.f32.xlu0 %v61
  %v63 = vpop.xlane.xlu0 %62
  %v64 = vadd.f32 %v26, %v27
  %65 = vadd.xlane.f32.xlu0 %v64
  %v66 = vpop.xlane.xlu0 %65
  %v67 = vadd.f32 %v28, %v29
  %68 = vadd.xlane.f32.xlu0 %v67
  %v69 = vpop.xlane.xlu0 %68
  %v70 = vadd.f32 %v30, %v31
  %71 = vadd.xlane.f32.xlu0 %v70
  %v72 = vpop.xlane.xlu0 %71
  %v73 = vadd.f32 %v32, %v33
  %74 = vadd.xlane.f32.xlu0 %v73
  %v75 = vpop.xlane.xlu0 %74
  %v76 = vadd.f32 %v34, %v35
  %77 = vadd.xlane.f32.xlu0 %v76
  %v78 = vpop.xlane.xlu0 %77
  %v79 = vadd.f32 %v36, %v37
  %80 = vadd.xlane.f32.xlu0 %v79
  %v81 = vpop.xlane.xlu0 %80
  %v82 = vadd.f32 %v38, %v39
  %83 = vadd.xlane.f32.xlu0 %v82
  %v84 = vpop.xlane.xlu0 %83
  %v85 = vadd.f32 %v40, %v41
  %86 = vadd.xlane.f32.xlu0 %v85
  %v87 = vpop.xlane.xlu0 %86
  %v88 = vadd.f32 %v42, %v43
  %89 = vadd.xlane.f32.xlu0 %v88
  %v90 = vpop.xlane.xlu0 %89
  %v91 = vadd.f32 %v44, %v45
  %92 = vadd.xlane.f32.xlu0 %v91
  %v93 = vpop.xlane.xlu0 %92
  %v94 = vmul.f32 %v48, 0.00390625
  %v95 = vmul.f32 %v51, 0.00390625
  %v96 = vmul.f32 %v54, 0.00390625
  %v97 = vmul.f32 %v57, 0.00390625
  %v98 = vmul.f32 %v60, 0.00390625
  %v99 = vmul.f32 %v63, 0.00390625
  %v100 = vmul.f32 %v66, 0.00390625
  %v101 = vmul.f32 %v69, 0.00390625
  %v102 = vmul.f32 %v72, 0.00390625
  %v103 = vmul.f32 %v75, 0.00390625
  %v104 = vmul.f32 %v78, 0.00390625
  %v105 = vmul.f32 %v81, 0.00390625
  %v106 = vmul.f32 %v84, 0.00390625
  %v107 = vmul.f32 %v87, 0.00390625
  %v108 = vmul.f32 %v90, 0.00390625
  %v109 = vmul.f32 %v93, 0.00390625
  %v110 = vmax.f32 %v14, %v15
  %111 = vmax.xlane.f32.xlu0 %v110
  %v112 = vpop.xlane.xlu0 %111
  %v113 = vmax.f32 %v16, %v17
  %114 = vmax.xlane.f32.xlu0 %v113
  %v115 = vpop.xlane.xlu0 %114
  %v116 = vmax.f32 %v18, %v19
  %117 = vmax.xlane.f32.xlu0 %v116
  %v118 = vpop.xlane.xlu0 %117
  %v119 = vmax.f32 %v20, %v21
  %120 = vmax.xlane.f32.xlu0 %v119
  %v121 = vpop.xlane.xlu0 %120
  %v122 = vmax.f32 %v22, %v23
  %123 = vmax.xlane.f32.xlu0 %v122
  %v124 = vpop.xlane.xlu0 %123
  %v125 = vmax.f32 %v24, %v25
  %126 = vmax.xlane.f32.xlu0 %v125
  %v127 = vpop.xlane.xlu0 %126
  %v128 = vmax.f32 %v26, %v27
  %129 = vmax.xlane.f32.xlu0 %v128
  %v130 = vpop.xlane.xlu0 %129
  %v131 = vmax.f32 %v28, %v29
  %132 = vmax.xlane.f32.xlu0 %v131
  %v133 = vpop.xlane.xlu0 %132
  %v134 = vmax.f32 %v30, %v31
  %135 = vmax.xlane.f32.xlu0 %v134
  %v136 = vpop.xlane.xlu0 %135
  %v137 = vmax.f32 %v32, %v33
  %138 = vmax.xlane.f32.xlu0 %v137
  %v139 = vpop.xlane.xlu0 %138
  %v140 = vmax.f32 %v34, %v35
  %141 = vmax.xlane.f32.xlu0 %v140
  %v142 = vpop.xlane.xlu0 %141
  %v143 = vmax.f32 %v36, %v37
  %144 = vmax.xlane.f32.xlu0 %v143
  %v145 = vpop.xlane.xlu0 %144
  %v146 = vmax.f32 %v38, %v39
  %147 = vmax.xlane.f32.xlu0 %v146
  %v148 = vpop.xlane.xlu0 %147
  %v149 = vmax.f32 %v40, %v41
  %150 = vmax.xlane.f32.xlu0 %v149
  %v151 = vpop.xlane.xlu0 %150
  %v152 = vmax.f32 %v42, %v43
  %153 = vmax.xlane.f32.xlu0 %v152
  %v154 = vpop.xlane.xlu0 %153
  %v155 = vmax.f32 %v44, %v45
  %156 = vmax.xlane.f32.xlu0 %v155
  %v157 = vpop.xlane.xlu0 %156
  %v158 = vld [vmem:[%s1] sm:$0xff]
  %v159 = vld [vmem:[%s1 + $0x8] sm:$0xff]
  %v160 = vld [vmem:[%s1 + $0x10] sm:$0xff]
  %v161 = vld [vmem:[%s1 + $0x18] sm:$0xff]
  %v162 = vld [vmem:[%s1 + $0x20] sm:$0xff]
  %v163 = vld [vmem:[%s1 + $0x28] sm:$0xff]
  %v164 = vld [vmem:[%s1 + $0x30] sm:$0xff]
  %v165 = vld [vmem:[%s1 + $0x38] sm:$0xff]
  %v166 = vld [vmem:[%s2] sm:$0xf]
  %v183 = vlaneseq
  %v184 = vand.u32 %v183, 127
  %v185 = vlaneseq
  %v186 = vshrl.u32 %v185, 7
  %v187 = vsub.s32 %v184, %v186
  %v188 = vrot.slane %v94, %v187
  %v189 = vadd.s32 %v184, 4294967288
  %v190 = vlaneseq
  %v191 = vshrl.u32 %v190, 7
  %v192 = vsub.s32 %v189, %v191
  %v193 = vrot.slane %v95, %v192
  %vm194 = vcmask 130112
  %v195 = vsel %vm194, %v193, %v188
  %v196 = vadd.s32 %v184, 4294967280
  %v197 = vlaneseq
  %v198 = vshrl.u32 %v197, 7
  %v199 = vsub.s32 %v196, %v198
  %v200 = vrot.slane %v96, %v199
  %vm201 = vcmask 195712
  %v202 = vsel %vm201, %v200, %v195
  %v203 = vadd.s32 %v184, 4294967272
  %v204 = vlaneseq
  %v205 = vshrl.u32 %v204, 7
  %v206 = vsub.s32 %v203, %v205
  %v207 = vrot.slane %v97, %v206
  %vm208 = vcmask 261312
  %v209 = vsel %vm208, %v207, %v202
  %v210 = vadd.s32 %v184, 4294967264
  %v211 = vlaneseq
  %v212 = vshrl.u32 %v211, 7
  %v213 = vsub.s32 %v210, %v212
  %v214 = vrot.slane %v98, %v213
  %vm215 = vcmask 326912
  %v216 = vsel %vm215, %v214, %v209
  %v217 = vadd.s32 %v184, 4294967256
  %v218 = vlaneseq
  %v219 = vshrl.u32 %v218, 7
  %v220 = vsub.s32 %v217, %v219
  %v221 = vrot.slane %v99, %v220
  %vm222 = vcmask 392512
  %v223 = vsel %vm222, %v221, %v216
  %v224 = vadd.s32 %v184, 4294967248
  %v225 = vlaneseq
  %v226 = vshrl.u32 %v225, 7
  %v227 = vsub.s32 %v224, %v226
  %v228 = vrot.slane %v100, %v227
  %vm229 = vcmask 458112
  %v230 = vsel %vm229, %v228, %v223
  %v231 = vadd.s32 %v184, 4294967240
  %v232 = vlaneseq
  %v233 = vshrl.u32 %v232, 7
  %v234 = vsub.s32 %v231, %v233
  %v235 = vrot.slane %v101, %v234
  %vm236 = vcmask 523712
  %v237 = vsel %vm236, %v235, %v230
  %v238 = vlaneseq
  %v239 = vshrl.u32 %v238, 7
  %v240 = vsub.s32 %v184, %v239
  %v241 = vrot.slane %v102, %v240
  %v242 = vlaneseq
  %v243 = vshrl.u32 %v242, 7
  %v244 = vsub.s32 %v189, %v243
  %v245 = vrot.slane %v103, %v244
  %v246 = vsel %vm194, %v245, %v241
  %v247 = vlaneseq
  %v248 = vshrl.u32 %v247, 7
  %v249 = vsub.s32 %v196, %v248
  %v250 = vrot.slane %v104, %v249
  %v251 = vsel %vm201, %v250, %v246
  %v252 = vlaneseq
  %v253 = vshrl.u32 %v252, 7
  %v254 = vsub.s32 %v203, %v253
  %v255 = vrot.slane %v105, %v254
  %v256 = vsel %vm208, %v255, %v251
  %v257 = vlaneseq
  %v258 = vshrl.u32 %v257, 7
  %v259 = vsub.s32 %v210, %v258
  %v260 = vrot.slane %v106, %v259
  %v261 = vsel %vm215, %v260, %v256
  %v262 = vlaneseq
  %v263 = vshrl.u32 %v262, 7
  %v264 = vsub.s32 %v217, %v263
  %v265 = vrot.slane %v107, %v264
  %v266 = vsel %vm222, %v265, %v261
  %v267 = vlaneseq
  %v268 = vshrl.u32 %v267, 7
  %v269 = vsub.s32 %v224, %v268
  %v270 = vrot.slane %v108, %v269
  %v271 = vsel %vm229, %v270, %v266
  %v272 = vlaneseq
  %v273 = vshrl.u32 %v272, 7
  %v274 = vsub.s32 %v231, %v273
  %v275 = vrot.slane %v109, %v274
  %v276 = vsel %vm236, %v275, %v271
  %vm277 = vcmask 1041409
  %v278 = vsel %vm277, %v276, %v237
  %v296 = vlaneseq
  %v297 = vshrl.u32 %v296, 7
  %v298 = vsub.s32 %v184, %v297
  %v299 = vrot.slane %v112, %v298
  %v300 = vlaneseq
  %v301 = vshrl.u32 %v300, 7
  %v302 = vsub.s32 %v189, %v301
  %v303 = vrot.slane %v115, %v302
  %v304 = vsel %vm194, %v303, %v299
  %v305 = vlaneseq
  %v306 = vshrl.u32 %v305, 7
  %v307 = vsub.s32 %v196, %v306
  %v308 = vrot.slane %v118, %v307
  %v309 = vsel %vm201, %v308, %v304
  %v310 = vlaneseq
  %v311 = vshrl.u32 %v310, 7
  %v312 = vsub.s32 %v203, %v311
  %v313 = vrot.slane %v121, %v312
  %v314 = vsel %vm208, %v313, %v309
  %v315 = vlaneseq
  %v316 = vshrl.u32 %v315, 7
  %v317 = vsub.s32 %v210, %v316
  %v318 = vrot.slane %v124, %v317
  %v319 = vsel %vm215, %v318, %v314
  %v320 = vlaneseq
  %v321 = vshrl.u32 %v320, 7
  %v322 = vsub.s32 %v217, %v321
  %v323 = vrot.slane %v127, %v322
  %v324 = vsel %vm222, %v323, %v319
  %v325 = vlaneseq
  %v326 = vshrl.u32 %v325, 7
  %v327 = vsub.s32 %v224, %v326
  %v328 = vrot.slane %v130, %v327
  %v329 = vsel %vm229, %v328, %v324
  %v330 = vlaneseq
  %v331 = vshrl.u32 %v330, 7
  %v332 = vsub.s32 %v231, %v331
  %v333 = vrot.slane %v133, %v332
  %v334 = vsel %vm236, %v333, %v329
  %v335 = vlaneseq
  %v336 = vshrl.u32 %v335, 7
  %v337 = vsub.s32 %v184, %v336
  %v338 = vrot.slane %v136, %v337
  %v339 = vlaneseq
  %v340 = vshrl.u32 %v339, 7
  %v341 = vsub.s32 %v189, %v340
  %v342 = vrot.slane %v139, %v341
  %v343 = vsel %vm194, %v342, %v338
  %v344 = vlaneseq
  %v345 = vshrl.u32 %v344, 7
  %v346 = vsub.s32 %v196, %v345
  %v347 = vrot.slane %v142, %v346
  %v348 = vsel %vm201, %v347, %v343
  %v349 = vlaneseq
  %v350 = vshrl.u32 %v349, 7
  %v351 = vsub.s32 %v203, %v350
  %v352 = vrot.slane %v145, %v351
  %v353 = vsel %vm208, %v352, %v348
  %v354 = vlaneseq
  %v355 = vshrl.u32 %v354, 7
  %v356 = vsub.s32 %v210, %v355
  %v357 = vrot.slane %v148, %v356
  %v358 = vsel %vm215, %v357, %v353
  %v359 = vlaneseq
  %v360 = vshrl.u32 %v359, 7
  %v361 = vsub.s32 %v217, %v360
  %v362 = vrot.slane %v151, %v361
  %v363 = vsel %vm222, %v362, %v358
  %v364 = vlaneseq
  %v365 = vshrl.u32 %v364, 7
  %v366 = vsub.s32 %v224, %v365
  %v367 = vrot.slane %v154, %v366
  %v368 = vsel %vm229, %v367, %v363
  %v369 = vlaneseq
  %v370 = vshrl.u32 %v369, 7
  %v371 = vsub.s32 %v231, %v370
  %v372 = vrot.slane %v157, %v371
  %v373 = vsel %vm236, %v372, %v368
  %vm374 = vcmask 1043459
  %v375 = vsel %vm374, %v373, %v334
  %vm377 = vcmask 1041408
  %v378 = vsel %vm377, %v278, %v375
  %vm379 = vcmask 523264
  %v381 = vsel %vm379, %v378, 0
  %383 = vmatprep.subr.mxu0 0.0
  %384 = vmatpush1.msra.mxu0 %v158
  %385 = vmatprep.subr.mxu0 0.0
  %386 = vmatpush1.msra.mxu0 %v159
  %387 = vmatprep.subr.mxu0 0.0
  %388 = vmatpush1.msra.mxu0 %v160
  %389 = vmatprep.subr.mxu0 0.0
  %390 = vmatpush1.msra.mxu0 %v161
  %391 = vmatprep.subr.mxu0 0.0
  %392 = vmatpush1.msra.mxu0 %v162
  %393 = vmatprep.subr.mxu0 0.0
  %394 = vmatpush1.msra.mxu0 %v163
  %395 = vmatprep.subr.mxu0 0.0
  %396 = vmatpush1.msra.mxu0 %v164
  %397 = vmatprep.subr.mxu0 0.0
  %398 = vmatpush1.msra.mxu0 %v165
  %399 = vmatprep.subr.mxu0 0.0
  %400 = vmatpush1.msra.mxu0 0.0
  %401 = vmatprep.subr.mxu0 0.0
  %402 = vmatpush1.msra.mxu0 0.0
  %403 = vmatprep.subr.mxu0 0.0
  %404 = vmatpush1.msra.mxu0 0.0
  %405 = vmatprep.subr.mxu0 0.0
  %406 = vmatpush1.msra.mxu0 0.0
  %407 = vmatprep.subr.mxu0 0.0
  %408 = vmatpush1.msra.mxu0 0.0
  %409 = vmatprep.subr.mxu0 0.0
  %410 = vmatpush1.msra.mxu0 0.0
  %411 = vmatprep.subr.mxu0 0.0
  %412 = vmatpush1.msra.mxu0 0.0
  %413 = vmatprep.subr.mxu0 0.0
  %414 = vmatpush1.msra.mxu0 0.0
  %415 = vmatprep.subr.mxu0 0.0
  %416 = vmatpush1.msra.mxu0 0.0
  %417 = vmatprep.subr.mxu0 0.0
  %418 = vmatpush1.msra.mxu0 0.0
  %419 = vmatprep.subr.mxu0 0.0
  %420 = vmatpush1.msra.mxu0 0.0
  %421 = vmatprep.subr.mxu0 0.0
  %422 = vmatpush1.msra.mxu0 0.0
  %423 = vmatprep.subr.mxu0 0.0
  %424 = vmatpush1.msra.mxu0 0.0
  %425 = vmatprep.subr.mxu0 0.0
  %426 = vmatpush1.msra.mxu0 0.0
  %427 = vmatprep.subr.mxu0 0.0
  %428 = vmatpush1.msra.mxu0 0.0
  %429 = vmatprep.subr.mxu0 0.0
  %430 = vmatpush1.msra.mxu0 0.0
  %431 = vmatprep.subr.mxu0 0.0
  %432 = vmatpush1.msra.mxu0 0.0
  %433 = vmatprep.subr.mxu0 0.0
  %434 = vmatpush1.msra.mxu0 0.0
  %435 = vmatprep.subr.mxu0 0.0
  %436 = vmatpush1.msra.mxu0 0.0
  %437 = vmatprep.subr.mxu0 0.0
  %438 = vmatpush1.msra.mxu0 0.0
  %439 = vmatprep.subr.mxu0 0.0
  %440 = vmatpush1.msra.mxu0 0.0
  %441 = vmatprep.subr.mxu0 0.0
  %442 = vmatpush1.msra.mxu0 0.0
  %443 = vmatprep.subr.mxu0 0.0
  %444 = vmatpush1.msra.mxu0 0.0
  %445 = vmatprep.subr.mxu0 0.0
  %446 = vmatpush1.msra.mxu0 0.0
  %447 = vmatprep.mubr.f32.mxu0 0.0
  %448 = vmatmul.mubr.f32.gmra.mrb[0].mxu0 %v381
  %v449 = vpop.f32.mrb[0].mxu0
  %v450 = vadd.f32 0.0, %v449
  %v451 = vpop.f32.mrb[0].mxu0
  %452 = vdwg.mxu0
  %v453 = vmax.f32 %v450, 0.0
  %vm454 = vcmask 31744
  %v456 = vsel %vm454, %v453, 0
  %vm458 = vcmask 1043456
  %v460 = vsel %vm458, %v166, 0
  %462 = vmatprep.subr.mxu0 0.0
  %463 = vmatpush1.msra.mxu0 %v460
  %464 = vmatprep.subr.mxu0 0.0
  %465 = vmatpush1.msra.mxu0 0.0
  %466 = vmatprep.subr.mxu0 0.0
  %467 = vmatpush1.msra.mxu0 0.0
  %468 = vmatprep.subr.mxu0 0.0
  %469 = vmatpush1.msra.mxu0 0.0
  %470 = vmatprep.subr.mxu0 0.0
  %471 = vmatpush1.msra.mxu0 0.0
  %472 = vmatprep.subr.mxu0 0.0
  %473 = vmatpush1.msra.mxu0 0.0
  %474 = vmatprep.subr.mxu0 0.0
  %475 = vmatpush1.msra.mxu0 0.0
  %476 = vmatprep.subr.mxu0 0.0
  %477 = vmatpush1.msra.mxu0 0.0
  %478 = vmatprep.subr.mxu0 0.0
  %479 = vmatpush1.msra.mxu0 0.0
  %480 = vmatprep.subr.mxu0 0.0
  %481 = vmatpush1.msra.mxu0 0.0
  %482 = vmatprep.subr.mxu0 0.0
  %483 = vmatpush1.msra.mxu0 0.0
  %484 = vmatprep.subr.mxu0 0.0
  %485 = vmatpush1.msra.mxu0 0.0
  %486 = vmatprep.subr.mxu0 0.0
  %487 = vmatpush1.msra.mxu0 0.0
  %488 = vmatprep.subr.mxu0 0.0
  %489 = vmatpush1.msra.mxu0 0.0
  %490 = vmatprep.subr.mxu0 0.0
  %491 = vmatpush1.msra.mxu0 0.0
  %492 = vmatprep.subr.mxu0 0.0
  %493 = vmatpush1.msra.mxu0 0.0
  %494 = vmatprep.subr.mxu0 0.0
  %495 = vmatpush1.msra.mxu0 0.0
  %496 = vmatprep.subr.mxu0 0.0
  %497 = vmatpush1.msra.mxu0 0.0
  %498 = vmatprep.subr.mxu0 0.0
  %499 = vmatpush1.msra.mxu0 0.0
  %500 = vmatprep.subr.mxu0 0.0
  %501 = vmatpush1.msra.mxu0 0.0
  %502 = vmatprep.subr.mxu0 0.0
  %503 = vmatpush1.msra.mxu0 0.0
  %504 = vmatprep.subr.mxu0 0.0
  %505 = vmatpush1.msra.mxu0 0.0
  %506 = vmatprep.subr.mxu0 0.0
  %507 = vmatpush1.msra.mxu0 0.0
  %508 = vmatprep.subr.mxu0 0.0
  %509 = vmatpush1.msra.mxu0 0.0
  %510 = vmatprep.subr.mxu0 0.0
  %511 = vmatpush1.msra.mxu0 0.0
  %512 = vmatprep.subr.mxu0 0.0
  %513 = vmatpush1.msra.mxu0 0.0
  %514 = vmatprep.subr.mxu0 0.0
  %515 = vmatpush1.msra.mxu0 0.0
  %516 = vmatprep.subr.mxu0 0.0
  %517 = vmatpush1.msra.mxu0 0.0
  %518 = vmatprep.subr.mxu0 0.0
  %519 = vmatpush1.msra.mxu0 0.0
  %520 = vmatprep.subr.mxu0 0.0
  %521 = vmatpush1.msra.mxu0 0.0
  %522 = vmatprep.subr.mxu0 0.0
  %523 = vmatpush1.msra.mxu0 0.0
  %524 = vmatprep.subr.mxu0 0.0
  %525 = vmatpush1.msra.mxu0 0.0
  %526 = vmatprep.mubr.f32.mxu0 0.0
  %527 = vmatmul.mubr.f32.gmra.mrb[0].mxu0 %v456
  %v528 = vpop.f32.mrb[0].mxu0
  %v529 = vadd.f32 0.0, %v528
  %v530 = vpop.f32.mrb[0].mxu0
  %531 = vdwg.mxu0
  %v533 = vrot.slane %v529, 2
  %v535 = vadd.f32 %v529, %v533
  %v536 = vxor.u32 %v535, 2147483648
  %v537 = vmul.f32 %v536, 1.442695
  %v538 = vpow.pop %v537
  %v539 = vadd.f32 %v538, 1.0
  %v540 = vrcp.pop %v539
  %v541 = vmul.f32 1.0, %v540
  %v542 = vlaneseq
  %v543 = vshrl.u32 %v542, 7
  %v544 = vsub.s32 0, %v543
  %v545 = vrot.slane %v541, %v544
  %547 = vbcast.lane.b32.xlu0 %v545, 256
  %v548 = vpop.permute.xlu0 %547
  %s550 = sor.u32 256, 8
  %551 = vbcast.lane.b32.xlu0 %v545, %s550
  %v552 = vpop.permute.xlu0 %551
  %s554 = sor.u32 256, 16
  %555 = vbcast.lane.b32.xlu0 %v545, %s554
  %v556 = vpop.permute.xlu0 %555
  %s558 = sor.u32 256, 24
  %559 = vbcast.lane.b32.xlu0 %v545, %s558
  %v560 = vpop.permute.xlu0 %559
  %s562 = sor.u32 256, 32
  %563 = vbcast.lane.b32.xlu0 %v545, %s562
  %v564 = vpop.permute.xlu0 %563
  %s566 = sor.u32 256, 40
  %567 = vbcast.lane.b32.xlu0 %v545, %s566
  %v568 = vpop.permute.xlu0 %567
  %s570 = sor.u32 256, 48
  %571 = vbcast.lane.b32.xlu0 %v545, %s570
  %v572 = vpop.permute.xlu0 %571
  %s574 = sor.u32 256, 56
  %575 = vbcast.lane.b32.xlu0 %v545, %s574
  %v576 = vpop.permute.xlu0 %575
  %v577 = vlaneseq
  %v578 = vshrl.u32 %v577, 7
  %v579 = vsub.s32 1, %v578
  %v580 = vrot.slane %v541, %v579
  %582 = vbcast.lane.b32.xlu0 %v580, 256
  %v583 = vpop.permute.xlu0 %582
  %s585 = sor.u32 256, 8
  %586 = vbcast.lane.b32.xlu0 %v580, %s585
  %v587 = vpop.permute.xlu0 %586
  %s589 = sor.u32 256, 16
  %590 = vbcast.lane.b32.xlu0 %v580, %s589
  %v591 = vpop.permute.xlu0 %590
  %s593 = sor.u32 256, 24
  %594 = vbcast.lane.b32.xlu0 %v580, %s593
  %v595 = vpop.permute.xlu0 %594
  %s597 = sor.u32 256, 32
  %598 = vbcast.lane.b32.xlu0 %v580, %s597
  %v599 = vpop.permute.xlu0 %598
  %s601 = sor.u32 256, 40
  %602 = vbcast.lane.b32.xlu0 %v580, %s601
  %v603 = vpop.permute.xlu0 %602
  %s605 = sor.u32 256, 48
  %606 = vbcast.lane.b32.xlu0 %v580, %s605
  %v607 = vpop.permute.xlu0 %606
  %s609 = sor.u32 256, 56
  %610 = vbcast.lane.b32.xlu0 %v580, %s609
  %v611 = vpop.permute.xlu0 %610
  %v612 = vmul.f32 %v14, %v548
  %v613 = vmul.f32 %v15, %v548
  %v614 = vmul.f32 %v16, %v552
  %v615 = vmul.f32 %v17, %v552
  %v616 = vmul.f32 %v18, %v556
  %v617 = vmul.f32 %v19, %v556
  %v618 = vmul.f32 %v20, %v560
  %v619 = vmul.f32 %v21, %v560
  %v620 = vmul.f32 %v22, %v564
  %v621 = vmul.f32 %v23, %v564
  %v622 = vmul.f32 %v24, %v568
  %v623 = vmul.f32 %v25, %v568
  %v624 = vmul.f32 %v26, %v572
  %v625 = vmul.f32 %v27, %v572
  %v626 = vmul.f32 %v28, %v576
  %v627 = vmul.f32 %v29, %v576
  %v628 = vmul.f32 %v30, %v583
  %v629 = vmul.f32 %v31, %v583
  %v630 = vmul.f32 %v32, %v587
  %v631 = vmul.f32 %v33, %v587
  %v632 = vmul.f32 %v34, %v591
  %v633 = vmul.f32 %v35, %v591
  %v634 = vmul.f32 %v36, %v595
  %v635 = vmul.f32 %v37, %v595
  %v636 = vmul.f32 %v38, %v599
  %v637 = vmul.f32 %v39, %v599
  %v638 = vmul.f32 %v40, %v603
  %v639 = vmul.f32 %v41, %v603
  %v640 = vmul.f32 %v42, %v607
  %v641 = vmul.f32 %v43, %v607
  %v642 = vmul.f32 %v44, %v611
  %v643 = vmul.f32 %v45, %v611
  %644 = vst [vmem:[%s3] sm:$0xff] %v612
  %645 = vst [vmem:[%s3 + $0x8] sm:$0xff] %v613
  %646 = vst [vmem:[%s3 + $0x10] sm:$0xff] %v614
  %647 = vst [vmem:[%s3 + $0x18] sm:$0xff] %v615
  %648 = vst [vmem:[%s3 + $0x20] sm:$0xff] %v616
  %649 = vst [vmem:[%s3 + $0x28] sm:$0xff] %v617
  %650 = vst [vmem:[%s3 + $0x30] sm:$0xff] %v618
  %651 = vst [vmem:[%s3 + $0x38] sm:$0xff] %v619
  %652 = vst [vmem:[%s3 + $0x40] sm:$0xff] %v620
  %653 = vst [vmem:[%s3 + $0x48] sm:$0xff] %v621
  %654 = vst [vmem:[%s3 + $0x50] sm:$0xff] %v622
  %655 = vst [vmem:[%s3 + $0x58] sm:$0xff] %v623
  %656 = vst [vmem:[%s3 + $0x60] sm:$0xff] %v624
  %657 = vst [vmem:[%s3 + $0x68] sm:$0xff] %v625
  %658 = vst [vmem:[%s3 + $0x70] sm:$0xff] %v626
  %659 = vst [vmem:[%s3 + $0x78] sm:$0xff] %v627
  %660 = vst [vmem:[%s3 + $0x80] sm:$0xff] %v628
  %661 = vst [vmem:[%s3 + $0x88] sm:$0xff] %v629
  %662 = vst [vmem:[%s3 + $0x90] sm:$0xff] %v630
  %663 = vst [vmem:[%s3 + $0x98] sm:$0xff] %v631
  %664 = vst [vmem:[%s3 + $0xa0] sm:$0xff] %v632
  %665 = vst [vmem:[%s3 + $0xa8] sm:$0xff] %v633
  %666 = vst [vmem:[%s3 + $0xb0] sm:$0xff] %v634
  %667 = vst [vmem:[%s3 + $0xb8] sm:$0xff] %v635
  %668 = vst [vmem:[%s3 + $0xc0] sm:$0xff] %v636
  %669 = vst [vmem:[%s3 + $0xc8] sm:$0xff] %v637
  %670 = vst [vmem:[%s3 + $0xd0] sm:$0xff] %v638
  %671 = vst [vmem:[%s3 + $0xd8] sm:$0xff] %v639
  %672 = vst [vmem:[%s3 + $0xe0] sm:$0xff] %v640
  %673 = vst [vmem:[%s3 + $0xe8] sm:$0xff] %v641
  %674 = vst [vmem:[%s3 + $0xf0] sm:$0xff] %v642
  %675 = vst [vmem:[%s3 + $0xf8] sm:$0xff] %v643
  // Predicated region
  $region14: #{channel_attention_forward.1} parent=0 // pred_check
    _
  $region15: #{channel_attention_forward.1} parent=0 // pred_check_branch
    %677 = sbr.rel (0) target = $region17
  $region16: #{channel_attention_forward.1} parent=0 // pred_region
    _
  $region17: #{channel_attention_forward.1} parent=0 // pred_fallthru
    _
  // Predicated region
  $region18: #{channel_attention_forward.1} parent=0 // pred_check
    _
  $region19: #{channel_attention_forward.1} parent=0 // pred_check_branch
    %679 = sbr.rel (0) target = $region21
  $region20: #{channel_attention_forward.1} parent=0 // pred_region
    _
  $region21: #{channel_attention_forward.1} parent=0 // pred_fallthru
    _

</llo_original>
